<compile_context>
chip_gen: v6e
topology: v6e:2x2x1
jax: 0.10.0
libtpu: 0.0.40
codegen_flags: <defaults>
</compile_context>

<pallas_src>
import jax
import jax.numpy as jnp
from jax import lax
from jax.experimental import pallas as pl
from jax.experimental.pallas import tpu as pltpu


def _softplus(x):
    # Numerically stable softplus: max(x, 0) + log1p(exp(-|x|))
    return jnp.maximum(x, 0.0) + jnp.log1p(jnp.exp(-jnp.abs(x)))


def ffnn_kernel(x_ref, w1_ref, b1_ref, w2_ref, b2_ref, out_ref):
    # fc1 + ReLU, batch-on-lanes:
    #   (H, in) . (tile_b, in) contracted on the feature dim -> (H, tile_b).
    # The x relayout (feature dim onto the contraction axis) happens in VMEM
    # (XLU), overlapped with the next tile's DMA.
    h = lax.dot_general(
        w1_ref[...], x_ref[...],
        dimension_numbers=(((1,), (1,)), ((), ())),
        preferred_element_type=jnp.float32,
    )
    h = jnp.maximum(h + b1_ref[...], 0.0)          # b1: (H, 1) lane-broadcast

    # dropout: eval mode -> identity (see TODO above)

    # fc2: (2, H) @ (H, tile_b) -> (2, tile_b), f32 accumulate, no upcast op.
    out = jnp.dot(w2_ref[...], h, preferred_element_type=jnp.float32)
    out = out + b2_ref[...]                        # b2: (2, 1)

    # Row 0 = mean, row 1 = softplus(logit).  Select with a row iota and emit
    # a single dense (2, tile_b) store (no partial-sublane stores; softplus on
    # the mean row is free EUP filler).
    row = lax.broadcasted_iota(jnp.int32, out.shape, 0)
    out_ref[...] = jnp.where(row == 1, _softplus(out), out)


def ffnn_forward(x, w1, b1, w2, b2, *, tile_b=16384):
    """FFNN forward (eval path).

    x : [B, input_dim]                 (f32 or bf16; bf16 halves HBM traffic)
    w1: [H, input_dim], b1: [H]        (PyTorch nn.Linear layouts)
    w2: [2, H],         b2: [2]
    Returns (mean[B], var[B]) as float32.

    Note: for the bf16 path pass x and w1 with matching dtype so the first
    matmul takes the native bf16 MXU path.
    """
    B, input_dim = x.shape
    H = w1.shape[0]

    # Lane-dense batch tile: multiple of 256 (MXU/lane alignment on all gens),
    # as large as useful but never larger than B rounded up to 256.
    tb = min(tile_b, 256 * pl.cdiv(B, 256))
    grid = (pl.cdiv(B, tb),)

    b1_2d = b1.reshape(H, 1).astype(jnp.float32)
    b2_2d = b2.reshape(2, 1).astype(jnp.float32)

    out = pl.pallas_call(
        ffnn_kernel,
        out_shape=jax.ShapeDtypeStruct((2, B), jnp.float32),
        grid=grid,
        in_specs=[
            pl.BlockSpec((tb, input_dim), lambda i: (i, 0)),  # streamed x tile
            pl.BlockSpec((H, input_dim), lambda i: (0, 0)),   # resident W1
            pl.BlockSpec((H, 1), lambda i: (0, 0)),           # resident b1
            pl.BlockSpec((2, H), lambda i: (0, 0)),           # resident W2
            pl.BlockSpec((2, 1), lambda i: (0, 0)),           # resident b2
        ],
        out_specs=pl.BlockSpec((2, tb), lambda i: (0, i)),
        compiler_params=pltpu.CompilerParams(
            dimension_semantics=("parallel",)),               # v7x: 2 TCs
    )(x, w1, b1_2d, w2, b2_2d)

    return out[0, :], out[1, :]


def init_params(key, input_dim, hidden_dim=20):
    """Deterministic kaiming_normal_(fan_in, relu) init, zero biases.

    Weights are kept in PyTorch layout: w1: [H, in], w2: [2, H].
    """
    k1, k2 = jax.random.split(key)
    std1 = (2.0 / input_dim) ** 0.5
    w1 = jax.random.normal(k1, (hidden_dim, input_dim), jnp.float32) * std1
    std2 = (2.0 / hidden_dim) ** 0.5
    w2 = jax.random.normal(k2, (2, hidden_dim), jnp.float32) * std2
    b1 = jnp.zeros((hidden_dim,), jnp.float32)
    b2 = jnp.zeros((2,), jnp.float32)
    return w1, b1, w2, b2


def reference_forward(x, w1, b1, w2, b2):
    h = jnp.maximum(x @ w1.T + b1, 0.0)
    out = h @ w2.T + b2
    return out[:, 0], jax.nn.softplus(out[:, 1])


if __name__ == "__main__":
    key = jax.random.PRNGKey(0)
    k_param, k_x1, k_x2 = jax.random.split(key, 3)

    input_dim, hidden_dim = 16, 20
    w1, b1, w2, b2 = init_params(k_param, input_dim, hidden_dim)

    # Small batch: one grid step, boundary-masked (B=8 < tile).
    x_small = jax.random.normal(k_x1, (8, input_dim), jnp.float32)
    mean_s, var_s = ffnn_forward(x_small, w1, b1, w2, b2)
    jax.block_until_ready((mean_s, var_s))
    ref_m, ref_v = reference_forward(x_small, w1, b1, w2, b2)
    assert jnp.allclose(mean_s, ref_m, atol=1e-4, rtol=1e-4)
    assert jnp.allclose(var_s, ref_v, atol=1e-4, rtol=1e-4)
    assert jnp.all(var_s > 0.0)

    # Ragged larger batch: exercises the no-pad boundary-masking path.
    x_big = jax.random.normal(k_x2, (1100, input_dim), jnp.float32)
    mean_b, var_b = ffnn_forward(x_big, w1, b1, w2, b2)
    jax.block_until_ready((mean_b, var_b))
    ref_m, ref_v = reference_forward(x_big, w1, b1, w2, b2)
    assert jnp.allclose(mean_b, ref_m, atol=1e-4, rtol=1e-4)
    assert jnp.allclose(var_b, ref_v, atol=1e-4, rtol=1e-4)
    assert jnp.all(var_b > 0.0)

    # bf16 input stream (recommended for HBM-bound deployments): halve the
    # dominant x traffic; f32 accumulation inside the kernel, loose tolerance.
    mean_h, var_h = ffnn_forward(
        x_big.astype(jnp.bfloat16), w1.astype(jnp.bfloat16), b1, w2, b2)
    jax.block_until_ready((mean_h, var_h))
    assert jnp.allclose(mean_h, ref_m, atol=3e-2, rtol=3e-2)
    assert jnp.allclose(var_h, ref_v, atol=3e-2, rtol=3e-2)

    print("KERNEL_OK")
</pallas_src>

<mosaic_0001>
module attributes {stable_mosaic.version = 11 : i64} {
  func.func @ffnn_kernel(%arg0: i32, %arg1: memref<256x16xf32, #tpu.memory_space<vmem>>, %arg2: memref<20x16xf32, #tpu.memory_space<vmem>>, %arg3: memref<20x1xf32, #tpu.memory_space<vmem>>, %arg4: memref<2x20xf32, #tpu.memory_space<vmem>>, %arg5: memref<2x1xf32, #tpu.memory_space<vmem>>, %arg6: memref<2x256xf32, #tpu.memory_space<vmem>>) attributes {dimension_semantics = [#tpu.dimension_semantics<parallel>], iteration_bounds = array<i64: 1>, scalar_prefetch = 0 : i64, scratch_operands = 0 : i64, tpu.core_type = #tpu.core_type<tc>, window_params = [{transform_indices = @transform_0, window_bounds = array<i64: 256, 16>}, {pipeline_mode = #tpu.pipeline_mode<synchronous>, transform_indices = @transform_1, window_bounds = array<i64: 20, 16>}, {pipeline_mode = #tpu.pipeline_mode<synchronous>, transform_indices = @transform_2, window_bounds = array<i64: 20, 1>}, {pipeline_mode = #tpu.pipeline_mode<synchronous>, transform_indices = @transform_3, window_bounds = array<i64: 2, 20>}, {pipeline_mode = #tpu.pipeline_mode<synchronous>, transform_indices = @transform_4, window_bounds = array<i64: 2, 1>}, {transform_indices = @transform_5, window_bounds = array<i64: 2, 256>}]} {
    %c0 = arith.constant 0 : index
    %c0_0 = arith.constant 0 : index
    %0 = vector.load %arg2[%c0, %c0_0] : memref<20x16xf32, #tpu.memory_space<vmem>>, vector<20x16xf32>
    %c0_1 = arith.constant 0 : index
    %c0_2 = arith.constant 0 : index
    %1 = vector.load %arg1[%c0_1, %c0_2] : memref<256x16xf32, #tpu.memory_space<vmem>>, vector<256x16xf32>
    %cst = arith.constant dense<0.000000e+00> : vector<20x256xf32>
    %2 = tpu.matmul %0, %1, %cst {dimension_numbers = #tpu.dot_dimension_numbers<[1], [1], [0], [0], [0, 0, 1, 0], [], []>} : vector<20x16xf32>, vector<256x16xf32>, vector<20x256xf32> -> vector<20x256xf32>
    %c0_3 = arith.constant 0 : index
    %c0_4 = arith.constant 0 : index
    %3 = vector.load %arg3[%c0_3, %c0_4] : memref<20x1xf32, #tpu.memory_space<vmem>>, vector<20x1xf32>
    %4 = vector.broadcast %3 : vector<20x1xf32> to vector<20x256xf32>
    %5 = arith.addf %2, %4 : vector<20x256xf32>
    %cst_5 = arith.constant 0.000000e+00 : f32
    %6 = vector.broadcast %cst_5 : f32 to vector<20x256xf32>
    %7 = arith.maximumf %5, %6 : vector<20x256xf32>
    %c0_6 = arith.constant 0 : index
    %c0_7 = arith.constant 0 : index
    %8 = vector.load %arg4[%c0_6, %c0_7] : memref<2x20xf32, #tpu.memory_space<vmem>>, vector<2x20xf32>
    %cst_8 = arith.constant dense<0.000000e+00> : vector<2x256xf32>
    %9 = tpu.matmul %8, %7, %cst_8 {dimension_numbers = #tpu.dot_dimension_numbers<[1], [0], [0], [1], [0, 0, 1, 1], [], []>} : vector<2x20xf32>, vector<20x256xf32>, vector<2x256xf32> -> vector<2x256xf32>
    %c0_9 = arith.constant 0 : index
    %c0_10 = arith.constant 0 : index
    %10 = vector.load %arg5[%c0_9, %c0_10] : memref<2x1xf32, #tpu.memory_space<vmem>>, vector<2x1xf32>
    %11 = vector.broadcast %10 : vector<2x1xf32> to vector<2x256xf32>
    %12 = arith.addf %9, %11 : vector<2x256xf32>
    %13 = tpu.iota {dimensions = array<i32: 0>} : vector<2x256xi32>
    %c1_i32 = arith.constant 1 : i32
    %14 = vector.broadcast %c1_i32 : i32 to vector<2x256xi32>
    %15 = arith.cmpi eq, %13, %14 : vector<2x256xi32>
    %cst_11 = arith.constant 0.000000e+00 : f32
    %16 = vector.broadcast %cst_11 : f32 to vector<2x256xf32>
    %17 = arith.maximumf %12, %16 : vector<2x256xf32>
    %18 = math.absf %12 : vector<2x256xf32>
    %cst_12 = arith.constant 0.000000e+00 : f32
    %19 = vector.broadcast %cst_12 : f32 to vector<2x256xf32>
    %20 = arith.subf %19, %18 : vector<2x256xf32>
    %21 = math.exp %20 : vector<2x256xf32>
    %22 = math.log1p %21 : vector<2x256xf32>
    %23 = arith.addf %17, %22 : vector<2x256xf32>
    %24 = arith.select %15, %23, %12 : vector<2x256xi1>, vector<2x256xf32>
    %c0_13 = arith.constant 0 : index
    %c0_14 = arith.constant 0 : index
    %25 = vector.load %arg6[%c0_13, %c0_14] : memref<2x256xf32, #tpu.memory_space<vmem>>, vector<2x256xf32>
    tpu.vector_store %arg6[%c0_13, %c0_14], %24 {strides = array<i32>} : memref<2x256xf32, #tpu.memory_space<vmem>>, vector<2x256xf32>,
    return
  }
  func.func @transform_0(%arg0: i32) -> (i32, i32) {
    %c0_i32 = arith.constant 0 : i32
    %c0_i32_0 = arith.constant 0 : i32
    return %arg0, %c0_i32 : i32, i32
  }
  func.func @transform_1(%arg0: i32) -> (i32, i32) {
    %c0_i32 = arith.constant 0 : i32
    %c0_i32_0 = arith.constant 0 : i32
    %c0_i32_1 = arith.constant 0 : i32
    return %c0_i32, %c0_i32_0 : i32, i32
  }
  func.func @transform_2(%arg0: i32) -> (i32, i32) {
    %c0_i32 = arith.constant 0 : i32
    %c0_i32_0 = arith.constant 0 : i32
    %c0_i32_1 = arith.constant 0 : i32
    return %c0_i32, %c0_i32_0 : i32, i32
  }
  func.func @transform_3(%arg0: i32) -> (i32, i32) {
    %c0_i32 = arith.constant 0 : i32
    %c0_i32_0 = arith.constant 0 : i32
    %c0_i32_1 = arith.constant 0 : i32
    return %c0_i32, %c0_i32_0 : i32, i32
  }
  func.func @transform_4(%arg0: i32) -> (i32, i32) {
    %c0_i32 = arith.constant 0 : i32
    %c0_i32_0 = arith.constant 0 : i32
    %c0_i32_1 = arith.constant 0 : i32
    return %c0_i32, %c0_i32_0 : i32, i32
  }
  func.func @transform_5(%arg0: i32) -> (i32, i32) {
    %c0_i32 = arith.constant 0 : i32
    %c0_i32_0 = arith.constant 0 : i32
    return %c0_i32, %arg0 : i32, i32
  }
}

</mosaic_0001>

<llo_original>
// kernel: tpu_custom_call.1
$region0: #{tpu_custom_call.1}
  #allocation0 [shape = 'u32[]', space=smem, size = 0x4, offset = 0x4, fixed_abs, tag = 'smem constant byte address 0x4 - core index']
  #allocation1 [shape = 'u32[144,128]{1,0:T(1,128)}', space=vmem, size = 0x12000, scoped, tag = 'internal scratch']
  %s0 = inlined_call_operand.vmem [shape: f32[8,16], index: 0, kind: input, shape index: {}]
  %s1 = inlined_call_operand.vmem [shape: f32[20,16], index: 1, kind: input, shape index: {}]
  %s2 = inlined_call_operand.vmem [shape: f32[20,1], index: 2, kind: input, shape index: {}]
  %s3 = inlined_call_operand.vmem [shape: f32[2,20], index: 3, kind: input, shape index: {}]
  %s4 = inlined_call_operand.vmem [shape: f32[2,1], index: 4, kind: input, shape index: {}]
  %s5 = inlined_call_operand.hbm [shape: f32[2,8], index: 5, kind: output, shape index: {}]
  %s6 = sld [smem:[#allocation0]]
  $region30: #{tpu_custom_call.1} parent=0
    _
  %s8 = ssub.s32 1, %s6
  %s9 = scalar_select 0, %s8, %s6
  $region1: #{tpu_custom_call.1} parent=0
    #allocation2 [shape = 'u8[2048]{0}', space=vmem, size = 0x800, scoped, tag = 'output window, operand 0, single buffered']
    #allocation3 [shape = 's32[1]{0}', space=sflag, size = 0x4, scoped, tag = 'scoped memory for tpu_custom_call.1']
    %10 = vsyncpa [#allocation3], 0
    // Predicated region
    $region2: #{tpu_custom_call.1} parent=1 // pred_check
      _
    $region3: #{tpu_custom_call.1} parent=1 // pred_check_branch
      %12 = sbr.rel (0) target = $region5
    $region4: #{tpu_custom_call.1} parent=1 // pred_region
      _
    $region5: #{tpu_custom_call.1} parent=1 // pred_fallthru
      _
    // Predicated region
    $region6: #{tpu_custom_call.1} parent=1 // pred_check
      _
    $region7: #{tpu_custom_call.1} parent=1 // pred_check_branch
      %14 = sbr.rel (0) target = $region9
    $region8: #{tpu_custom_call.1} parent=1 // pred_region
      _
    $region9: #{tpu_custom_call.1} parent=1 // pred_fallthru
      _
    // Predicated region
    $region10: #{tpu_custom_call.1} parent=1 // pred_check
      _
    $region11: #{tpu_custom_call.1} parent=1 // pred_check_branch
      %16 = sbr.rel (0) target = $region13
    $region12: #{tpu_custom_call.1} parent=1 // pred_region
      _
    $region13: #{tpu_custom_call.1} parent=1 // pred_fallthru
      _
    // Predicated region
    $region14: #{tpu_custom_call.1} parent=1 // pred_check
      _
    $region15: #{tpu_custom_call.1} parent=1 // pred_check_branch
      %18 = sbr.rel (0) target = $region17
    $region16: #{tpu_custom_call.1} parent=1 // pred_region
      _
    $region17: #{tpu_custom_call.1} parent=1 // pred_fallthru
      _
    // Predicated region
    $region18: #{tpu_custom_call.1} parent=1 // pred_check
      _
    $region19: #{tpu_custom_call.1} parent=1 // pred_check_branch
      %20 = sbr.rel (0) target = $region21
    $region20: #{tpu_custom_call.1} parent=1 // pred_region
      _
    $region21: #{tpu_custom_call.1} parent=1 // pred_fallthru
      _
    %v21 = vld [vmem:[%s1] sm:$0xff]
    %v22 = vld [vmem:[%s1 + $0x8] sm:$0xff]
    %v23 = vld [vmem:[%s1 + $0x10] sm:$0xf]
    %v24 = vld [vmem:[%s0] sm:$0xff]
    %v25 = vld [vmem:[%s0 + $0x8] sm:$0xff]
    %v26 = vld [vmem:[%s0 + $0x10] sm:$0xff]
    %v27 = vld [vmem:[%s0 + $0x18] sm:$0xff]
    %v28 = vld [vmem:[%s0 + $0x20] sm:$0xff]
    %v29 = vld [vmem:[%s0 + $0x28] sm:$0xff]
    %v30 = vld [vmem:[%s0 + $0x30] sm:$0xff]
    %v31 = vld [vmem:[%s0 + $0x38] sm:$0xff]
    %v32 = vld [vmem:[%s0 + $0x40] sm:$0xff]
    %v33 = vld [vmem:[%s0 + $0x48] sm:$0xff]
    %v34 = vld [vmem:[%s0 + $0x50] sm:$0xff]
    %v35 = vld [vmem:[%s0 + $0x58] sm:$0xff]
    %v36 = vld [vmem:[%s0 + $0x60] sm:$0xff]
    %v37 = vld [vmem:[%s0 + $0x68] sm:$0xff]
    %v38 = vld [vmem:[%s0 + $0x70] sm:$0xff]
    %v39 = vld [vmem:[%s0 + $0x78] sm:$0xff]
    %v40 = vld [vmem:[%s0 + $0x80] sm:$0xff]
    %v41 = vld [vmem:[%s0 + $0x88] sm:$0xff]
    %v42 = vld [vmem:[%s0 + $0x90] sm:$0xff]
    %v43 = vld [vmem:[%s0 + $0x98] sm:$0xff]
    %v44 = vld [vmem:[%s0 + $0xa0] sm:$0xff]
    %v45 = vld [vmem:[%s0 + $0xa8] sm:$0xff]
    %v46 = vld [vmem:[%s0 + $0xb0] sm:$0xff]
    %v47 = vld [vmem:[%s0 + $0xb8] sm:$0xff]
    %v48 = vld [vmem:[%s0 + $0xc0] sm:$0xff]
    %v49 = vld [vmem:[%s0 + $0xc8] sm:$0xff]
    %v50 = vld [vmem:[%s0 + $0xd0] sm:$0xff]
    %v51 = vld [vmem:[%s0 + $0xd8] sm:$0xff]
    %v52 = vld [vmem:[%s0 + $0xe0] sm:$0xff]
    %v53 = vld [vmem:[%s0 + $0xe8] sm:$0xff]
    %v54 = vld [vmem:[%s0 + $0xf0] sm:$0xff]
    %v55 = vld [vmem:[%s0 + $0xf8] sm:$0xff]
    %v56 = vld [vmem:[%s2] sm:$0xff]
    %v57 = vld [vmem:[%s2 + $0x8] sm:$0xff]
    %v58 = vld [vmem:[%s2 + $0x10] sm:$0xf]
    %60 = vset.pattern.permute.xlu0 0
    %61 = vperm.xlu0 %60, %v56
    %v62 = vpop.permute.xlu0 %61
    %65 = vset.pattern.permute.xlu0 0
    %66 = vperm.xlu0 %65, %v57
    %v67 = vpop.permute.xlu0 %66
    %70 = vset.pattern.permute.xlu0 0
    %71 = vperm.xlu0 %70, %v58
    %v72 = vpop.permute.xlu0 %71
    %vm74 = vcmask 130048
    %v76 = vsel %vm74, %v21, 0
    %v79 = vsel %vm74, %v22, 0
    %v82 = vsel %vm74, %v23, 0
    %v85 = vsel %vm74, %v24, 0
    %v88 = vsel %vm74, %v25, 0
    %v91 = vsel %vm74, %v26, 0
    %v94 = vsel %vm74, %v27, 0
    %v97 = vsel %vm74, %v28, 0
    %v100 = vsel %vm74, %v29, 0
    %v103 = vsel %vm74, %v30, 0
    %v106 = vsel %vm74, %v31, 0
    %v109 = vsel %vm74, %v32, 0
    %v112 = vsel %vm74, %v33, 0
    %v115 = vsel %vm74, %v34, 0
    %v118 = vsel %vm74, %v35, 0
    %v121 = vsel %vm74, %v36, 0
    %v124 = vsel %vm74, %v37, 0
    %v127 = vsel %vm74, %v38, 0
    %v130 = vsel %vm74, %v39, 0
    %v133 = vsel %vm74, %v40, 0
    %v136 = vsel %vm74, %v41, 0
    %v139 = vsel %vm74, %v42, 0
    %v142 = vsel %vm74, %v43, 0
    %v145 = vsel %vm74, %v44, 0
    %v148 = vsel %vm74, %v45, 0
    %v151 = vsel %vm74, %v46, 0
    %v154 = vsel %vm74, %v47, 0
    %v157 = vsel %vm74, %v48, 0
    %v160 = vsel %vm74, %v49, 0
    %v163 = vsel %vm74, %v50, 0
    %v166 = vsel %vm74, %v51, 0
    %v169 = vsel %vm74, %v52, 0
    %v172 = vsel %vm74, %v53, 0
    %v175 = vsel %vm74, %v54, 0
    %v178 = vsel %vm74, %v55, 0
    %180 = vmatprep.subr.mxu0 0.0
    %181 = vmatpush1.xpose.msra.mxu0 %v130
    %182 = vmatprep.subr.mxu0 0.0
    %183 = vmatpush1.xpose.msra.mxu0 %v127
    %184 = vmatprep.subr.mxu0 0.0
    %185 = vmatpush1.xpose.msra.mxu0 %v124
    %186 = vmatprep.subr.mxu0 0.0
    %187 = vmatpush1.xpose.msra.mxu0 %v121
    %188 = vmatprep.subr.mxu0 0.0
    %189 = vmatpush1.xpose.msra.mxu0 %v118
    %190 = vmatprep.subr.mxu0 0.0
    %191 = vmatpush1.xpose.msra.mxu0 %v115
    %192 = vmatprep.subr.mxu0 0.0
    %193 = vmatpush1.xpose.msra.mxu0 %v112
    %194 = vmatprep.subr.mxu0 0.0
    %195 = vmatpush1.xpose.msra.mxu0 %v109
    %196 = vmatprep.subr.mxu0 0.0
    %197 = vmatpush1.xpose.msra.mxu0 %v106
    %198 = vmatprep.subr.mxu0 0.0
    %199 = vmatpush1.xpose.msra.mxu0 %v103
    %200 = vmatprep.subr.mxu0 0.0
    %201 = vmatpush1.xpose.msra.mxu0 %v100
    %202 = vmatprep.subr.mxu0 0.0
    %203 = vmatpush1.xpose.msra.mxu0 %v97
    %204 = vmatprep.subr.mxu0 0.0
    %205 = vmatpush1.xpose.msra.mxu0 %v94
    %206 = vmatprep.subr.mxu0 0.0
    %207 = vmatpush1.xpose.msra.mxu0 %v91
    %208 = vmatprep.subr.mxu0 0.0
    %209 = vmatpush1.xpose.msra.mxu0 %v88
    %210 = vmatprep.subr.mxu0 0.0
    %211 = vmatpush1.xpose.msra.mxu0 %v85
    %212 = vmatprep.subr.mxu0 0.0
    %213 = vmatpush2.xpose.msra.mxu0 %v178
    %214 = vmatprep.subr.mxu0 0.0
    %215 = vmatpush2.xpose.msra.mxu0 %v175
    %216 = vmatprep.subr.mxu0 0.0
    %217 = vmatpush2.xpose.msra.mxu0 %v172
    %218 = vmatprep.subr.mxu0 0.0
    %219 = vmatpush2.xpose.msra.mxu0 %v169
    %220 = vmatprep.subr.mxu0 0.0
    %221 = vmatpush2.xpose.msra.mxu0 %v166
    %222 = vmatprep.subr.mxu0 0.0
    %223 = vmatpush2.xpose.msra.mxu0 %v163
    %224 = vmatprep.subr.mxu0 0.0
    %225 = vmatpush2.xpose.msra.mxu0 %v160
    %226 = vmatprep.subr.mxu0 0.0
    %227 = vmatpush2.xpose.msra.mxu0 %v157
    %228 = vmatprep.subr.mxu0 0.0
    %229 = vmatpush2.xpose.msra.mxu0 %v154
    %230 = vmatprep.subr.mxu0 0.0
    %231 = vmatpush2.xpose.msra.mxu0 %v151
    %232 = vmatprep.subr.mxu0 0.0
    %233 = vmatpush2.xpose.msra.mxu0 %v148
    %234 = vmatprep.subr.mxu0 0.0
    %235 = vmatpush2.xpose.msra.mxu0 %v145
    %236 = vmatprep.subr.mxu0 0.0
    %237 = vmatpush2.xpose.msra.mxu0 %v142
    %238 = vmatprep.subr.mxu0 0.0
    %239 = vmatpush2.xpose.msra.mxu0 %v139
    %240 = vmatprep.subr.mxu0 0.0
    %241 = vmatpush2.xpose.msra.mxu0 %v136
    %242 = vmatprep.subr.mxu0 0.0
    %243 = vmatpush2.xpose.msra.mxu0 %v133
    %244 = vmatprep.mubr.f32.mxu0 0.0
    %245 = vmatmul.mubr.f32.gmra.mxu0 %v76
    %v246 = vpop.f32.mrf.mxu0
    %v247 = vadd.f32 %v62, %v246
    %v248 = vpop.f32.mrf.mxu0
    %v249 = vadd.f32 %v62, %v248
    %250 = vmatprep.mubr.f32.mxu0 0.0
    %251 = vmatmul.mubr.f32.gmra.mxu0 %v79
    %v252 = vpop.f32.mrf.mxu0
    %v253 = vadd.f32 %v67, %v252
    %v254 = vpop.f32.mrf.mxu0
    %v255 = vadd.f32 %v67, %v254
    %256 = vmatprep.mubr.f32.mxu0 0.0
    %257 = vmatmul.mubr.f32.gmra.mxu0 %v82
    %v258 = vpop.f32.mrf.mxu0
    %v259 = vadd.f32 %v72, %v258
    %v260 = vpop.f32.mrf.mxu0
    %v261 = vadd.f32 %v72, %v260
    %262 = vdwg.mxu0
    %v263 = vmax.f32 %v247, 0.0
    %v264 = vmax.f32 %v249, 0.0
    %v265 = vmax.f32 %v253, 0.0
    %v266 = vmax.f32 %v255, 0.0
    %v267 = vmax.f32 %v259, 0.0
    %v268 = vmax.f32 %v261, 0.0
    %v269 = vld [vmem:[%s3] sm:$0x3]
    %v270 = vld [vmem:[%s4] sm:$0x3]
    %272 = vset.pattern.permute.xlu0 0
    %273 = vperm.xlu0 %272, %v270
    %v274 = vpop.permute.xlu0 %273
    %vm276 = vcmask 162816
    %v278 = vsel %vm276, %v269, 0
    %vm280 = vcmask 1043456
    %v282 = vsel %vm280, %v267, 0
    %v285 = vsel %vm280, %v268, 0
    %287 = vmatprep.subr.mxu0 0.0
    %288 = vmatpush1.msra.mxu0 0.0
    %289 = vmatprep.subr.mxu0 0.0
    %290 = vmatpush1.msra.mxu0 0.0
    %291 = vmatprep.subr.mxu0 0.0
    %292 = vmatpush1.msra.mxu0 0.0
    %293 = vmatprep.subr.mxu0 0.0
    %294 = vmatpush1.msra.mxu0 0.0
    %295 = vmatprep.subr.mxu0 0.0
    %296 = vmatpush1.msra.mxu0 0.0
    %297 = vmatprep.subr.mxu0 0.0
    %298 = vmatpush1.msra.mxu0 0.0
    %299 = vmatprep.subr.mxu0 0.0
    %300 = vmatpush1.msra.mxu0 0.0
    %301 = vmatprep.subr.mxu0 0.0
    %302 = vmatpush1.msra.mxu0 0.0
    %303 = vmatprep.subr.mxu0 0.0
    %304 = vmatpush1.msra.mxu0 0.0
    %305 = vmatprep.subr.mxu0 0.0
    %306 = vmatpush1.msra.mxu0 0.0
    %307 = vmatprep.subr.mxu0 0.0
    %308 = vmatpush1.msra.mxu0 0.0
    %309 = vmatprep.subr.mxu0 0.0
    %310 = vmatpush1.msra.mxu0 0.0
    %311 = vmatprep.subr.mxu0 0.0
    %312 = vmatpush1.msra.mxu0 0.0
    %313 = vmatprep.subr.mxu0 %v285
    %314 = vmatpush1.msra.mxu0 %v282
    %315 = vmatprep.subr.mxu0 %v266
    %316 = vmatpush1.msra.mxu0 %v265
    %317 = vmatprep.subr.mxu0 %v264
    %318 = vmatpush1.msra.mxu0 %v263
    %319 = vmatprep.subr.mxu0 0.0
    %320 = vmatpush2.msra.mxu0 0.0
    %321 = vmatprep.subr.mxu0 0.0
    %322 = vmatpush2.msra.mxu0 0.0
    %323 = vmatprep.subr.mxu0 0.0
    %324 = vmatpush2.msra.mxu0 0.0
    %325 = vmatprep.subr.mxu0 0.0
    %326 = vmatpush2.msra.mxu0 0.0
    %327 = vmatprep.subr.mxu0 0.0
    %328 = vmatpush2.msra.mxu0 0.0
    %329 = vmatprep.subr.mxu0 0.0
    %330 = vmatpush2.msra.mxu0 0.0
    %331 = vmatprep.subr.mxu0 0.0
    %332 = vmatpush2.msra.mxu0 0.0
    %333 = vmatprep.subr.mxu0 0.0
    %334 = vmatpush2.msra.mxu0 0.0
    %335 = vmatprep.subr.mxu0 0.0
    %336 = vmatpush2.msra.mxu0 0.0
    %337 = vmatprep.subr.mxu0 0.0
    %338 = vmatpush2.msra.mxu0 0.0
    %339 = vmatprep.subr.mxu0 0.0
    %340 = vmatpush2.msra.mxu0 0.0
    %341 = vmatprep.subr.mxu0 0.0
    %342 = vmatpush2.msra.mxu0 0.0
    %343 = vmatprep.subr.mxu0 0.0
    %344 = vmatpush2.msra.mxu0 0.0
    %345 = vmatprep.subr.mxu0 0.0
    %346 = vmatpush2.msra.mxu0 0.0
    %347 = vmatprep.subr.mxu0 0.0
    %348 = vmatpush2.msra.mxu0 0.0
    %349 = vmatprep.subr.mxu0 0.0
    %350 = vmatpush2.msra.mxu0 0.0
    %351 = vmatprep.mubr.f32.mxu0 0.0
    %352 = vmatmul.mubr.f32.gmra.mxu0 %v278
    %v353 = vpop.f32.mrf.mxu0
    %v354 = vadd.f32 %v274, %v353
    %v355 = vpop.f32.mrf.mxu0
    %v356 = vadd.f32 %v274, %v355
    %357 = vdwg.mxu0
    %v358 = vlaneseq
    %v359 = vshrl.u32 %v358, 7
    %vm360 = vcmp.eq.s32.totalorder %v359, 1
    %v361 = vmax.f32 %v354, 0.0
    %v362 = vmax.f32 %v356, 0.0
    %v363 = vand.u32 2147483647, %v354
    %v364 = vand.u32 2147483647, %v356
    %v365 = vsub.f32 0.0, %v363
    %v366 = vsub.f32 0.0, %v364
    %v367 = vmul.f32 %v365, 1.442695
    %v368 = vpow.pop %v367
    %v369 = vmul.f32 %v366, 1.442695
    %v370 = vpow.pop %v369
    %v371 = vadd.f32 %v368, 1.0
    %v372 = vlog2.pop %v371
    %v373 = vmul.f32 %v372, 0.6931472
    %v374 = vmul.f32 -0.5, %v368
    %v375 = vadd.f32 %v374, 1.0
    %v376 = vmul.f32 %v375, %v368
    %v377 = vand.u32 2147483647, %v368
    %vm378 = vcmp.lt.f32.partialorder %v377, 0.0004427343
    %v379 = vsel %vm378, %v376, %v373
    %v380 = vadd.f32 %v370, 1.0
    %v381 = vlog2.pop %v380
    %v382 = vmul.f32 %v381, 0.6931472
    %v383 = vmul.f32 -0.5, %v370
    %v384 = vadd.f32 %v383, 1.0
    %v385 = vmul.f32 %v384, %v370
    %v386 = vand.u32 2147483647, %v370
    %vm387 = vcmp.lt.f32.partialorder %v386, 0.0004427343
    %v388 = vsel %vm387, %v385, %v382
    %v389 = vadd.f32 %v361, %v379
    %v390 = vadd.f32 %v362, %v388
    %v391 = vsel %vm360, %v389, %v354
    %v392 = vsel %vm360, %v390, %v356
    %v395 = vcombine.low %v391, %v392
    %v397 = vunpack.c.l.s4 1983009808
    %v398 = vunpack.c.0.s8 %v397
    %v399 = vlaneseq
    %v400 = vshrl.u32 %v399, 7
    %v401 = vsub.s32 %v398, %v400
    %v402 = vrot.slane %v395, %v401
    %404 = vst [vmem:[#allocation2] sm:$0xf] %v402
    // Predicated region
    $region22: #{tpu_custom_call.1} parent=1 // pred_check
      _
    $region23: #{tpu_custom_call.1} parent=1 // pred_check_branch
      %406 = sbr.rel (0) target = $region25
    $region24: #{tpu_custom_call.1} parent=1 // pred_region
      %s408 = ssub.s32 64, 32
      %409 = vsyncadd [#allocation3], %s408
      %s411 = sshll.u32 [#allocation2], 4
      %s412 = int_to_ptr.vmem [resolvable:$true] %s411
      %414 = dma.vmem_to_hbm [thread:$0]  %s412, 32, %s5, [#allocation3]
    $region25: #{tpu_custom_call.1} parent=1 // pred_fallthru
      _
    // Predicated region
    $region26: #{tpu_custom_call.1} parent=1 // pred_check
      _
    $region27: #{tpu_custom_call.1} parent=1 // pred_check_branch
      %416 = sbr.rel (0) target = $region29
    $region28: #{tpu_custom_call.1} parent=1 // pred_region
      %417 = dma.done [#allocation3], 64
    $region29: #{tpu_custom_call.1} parent=1 // pred_fallthru
      _
    %418 = vsyncpa [#allocation3], 1

</llo_original>
